<compile_context>
chip_gen: v6e
topology: v6e:2x2x1
jax: 0.10.0
libtpu: 0.0.40
codegen_flags: <defaults>
</compile_context>

<pallas_src>
import functools

import numpy as np
import jax
import jax.numpy as jnp
from jax import lax
from jax.experimental import pallas as pl
from jax.experimental.pallas import tpu as pltpu


# ---------------------------------------------------------------------------
# Sinusoidal table — identical to the PyTorch __init__.
# ---------------------------------------------------------------------------
def make_positional_encoding(max_len: int, d_model: int) -> jnp.ndarray:
    position = np.arange(max_len, dtype=np.float32)[:, None]               # (max_len, 1)
    div_term = np.exp(np.arange(0, d_model, 2, dtype=np.float32)
                      * (-np.log(10000.0) / d_model))                      # (d_model/2,)
    pe = np.zeros((max_len, d_model), dtype=np.float32)
    pe[:, 0::2] = np.sin(position * div_term)
    pe[:, 1::2] = np.cos(position * div_term)
    return jnp.asarray(pe)                                                 # (max_len, d_model)


# murmur3 fmix32 constants, expressed as int32 (two's-complement) values.
_GOLD = -1640531535      # 0x9E3779B1
_C1 = -2048144789        # 0x85EBCA6B
_C2 = -1028477387        # 0xC2B2AE35
_SIGN = -2147483648      # 0x80000000


def _repeat_lanes(t: jnp.ndarray, reps: int) -> jnp.ndarray:
    """[t | t | ... | t] (`reps` copies) along the last axis, O(log reps) concats.

    Static shapes/slices only, so it lowers cleanly in Mosaic; this is pure
    VMEM vector work that hides under the HBM-bound roofline.
    """
    if reps == 1:
        return t
    d = t.shape[-1]
    out = t
    built = 1
    while built < reps:
        take = min(built, reps - built)
        piece = out if take == built else out[:, : take * d]
        out = jnp.concatenate([out, piece], axis=-1)
        built += take
    return out


def _pe_kernel(seed_ref, x_ref, pe_ref, o_ref, *,
               p: float, training: bool, rows_per_tile: int, width: int,
               batch: int):
    """y = x + broadcast(pe) on a lane-dense (ts, B*D) slab, optional dropout.

    x_ref/o_ref: (ts, B*D) VMEM tiles.  pe_ref: (ts, D) VMEM tile.
    seed_ref: (1,) int32 scalar in SMEM (scalar-prefetched).
    """
    pe_slab = _repeat_lanes(pe_ref[...].astype(jnp.float32), batch)   # (ts, B*D)
    y = x_ref[...].astype(jnp.float32) + pe_slab

    if training and p > 0.0:
        # Counter-based hash dropout (murmur3 finalizer on the global element
        # index mixed with the seed).  All int32 ops: arithmetic shift + mask
        # emulates a logical shift, and the final unsigned compare uses the
        # sign-bit-flip trick.
        thresh_u = min(max(int(round(p * 4294967296.0)), 0), 4294967295)
        tbits = thresh_u ^ 0x80000000
        thresh_s = tbits - 4294967296 if tbits >= 2147483648 else tbits

        seed = seed_ref[0]
        tile = pl.program_id(0)
        row = lax.broadcasted_iota(jnp.int32, y.shape, 0)
        col = lax.broadcasted_iota(jnp.int32, y.shape, 1)
        idx = (tile * rows_per_tile + row) * width + col      # global element id

        h = idx ^ (seed * jnp.int32(_GOLD))
        h = h ^ ((h >> 16) & 0xFFFF)
        h = h * jnp.int32(_C1)
        h = h ^ ((h >> 13) & 0x7FFFF)
        h = h * jnp.int32(_C2)
        h = h ^ ((h >> 16) & 0xFFFF)

        # keep  <=>  (uint32)h >= p * 2^32
        keep = (h ^ jnp.int32(_SIGN)) >= jnp.int32(thresh_s)
        y = jnp.where(keep, y * jnp.float32(1.0 / (1.0 - p)), jnp.float32(0.0))

    o_ref[...] = y.astype(o_ref.dtype)


def _pick_seq_tile(S: int, W: int, itemsize: int = 4,
                   slab_budget_bytes: int = 2 * 1024 * 1024) -> int:
    """Largest legal seq tile whose (ts, W) slab stays under the budget.

    Per grid step VMEM ~= 2 (double buffer) x ~3 (x, pe, out) x ts*W*itemsize,
    so a 2 MiB slab budget keeps roughly 12 MiB of pipeline buffers plus
    elementwise temporaries — safe on v5e/v6e (128 MiB VMEM) and v7x (64 MiB).
    """
    max_rows = max(1, slab_budget_bytes // max(1, W * itemsize))
    if S <= max_rows:
        return S
    for ts in range(min(S, max_rows), 0, -1):
        # second-to-last block dim must be a multiple of 8 (or the full extent)
        if S % ts == 0 and (ts % 8 == 0 or ts == S):
            return ts
    return S  # pathological S: single full-extent tile (always legal)


def positional_encoding_forward(x, pe_table, *, p=0.1, training=False, seed=0,
                                seq_tile=None):
    """x: (S, B, D) float32. Returns x + pe[:S] (+ inverted dropout if training)."""
    S, B, D = x.shape
    W = B * D

    # Lane-dense 2-D slab for x/out (free row-major bitcast); pe streamed as
    # the small (S, D) table and broadcast over batch inside the kernel.
    x2 = x.reshape(S, W)
    pe2 = pe_table[:S, :]                                        # (S, D)

    ts = _pick_seq_tile(S, W) if seq_tile is None else seq_tile
    assert S % ts == 0, f"seq_tile {ts} must divide S={S}"
    grid = (S // ts,)

    seed_arr = jnp.asarray([seed], dtype=jnp.int32)
    kernel = functools.partial(_pe_kernel, p=float(p), training=bool(training),
                               rows_per_tile=ts, width=W, batch=B)

    grid_spec = pltpu.PrefetchScalarGridSpec(
        num_scalar_prefetch=1,                                   # seed lands in SMEM
        grid=grid,
        in_specs=[
            pl.BlockSpec((ts, W), lambda i, seed_ref: (i, 0)),   # x slab
            pl.BlockSpec((ts, D), lambda i, seed_ref: (i, 0)),   # pe rows (S, D)
        ],
        out_specs=pl.BlockSpec((ts, W), lambda i, seed_ref: (i, 0)),
    )

    out2 = pl.pallas_call(
        kernel,
        out_shape=jax.ShapeDtypeStruct((S, W), x.dtype),
        grid_spec=grid_spec,
        compiler_params=pltpu.CompilerParams(
            dimension_semantics=("parallel",),                   # independent seq tiles
            vmem_limit_bytes=32 * 1024 * 1024),
    )(seed_arr, x2, pe2)

    return out2.reshape(S, B, D)


if __name__ == "__main__":
    # Small shapes consistent with the transformer usage: seq=8, batch=2, d_model=32
    S, B, D = 8, 2, 32
    max_len = 5000

    key = jax.random.PRNGKey(0)
    x = jax.random.normal(key, (S, B, D), dtype=jnp.float32)
    pe_table = make_positional_encoding(max_len, D)

    # Eval mode (dropout = identity): deterministic, matches PyTorch module.eval()
    out = positional_encoding_forward(x, pe_table, p=0.1, training=False)
    out = jax.block_until_ready(out)
    ref = x + pe_table[:S, :][:, None, :]
    np.testing.assert_allclose(np.asarray(out), np.asarray(ref), rtol=1e-6, atol=1e-6)

    # Training mode: in-kernel inverted dropout (counter-based hash RNG).
    # TODO(synk): RNG stream differs from torch.nn.Dropout (different generator),
    # but the statistical semantics (Bernoulli(p) zeroing + 1/(1-p) scaling) match.
    p = 0.1
    out_train = positional_encoding_forward(x, pe_table, p=p, training=True, seed=42)
    out_train = jax.block_until_ready(out_train)
    ot = np.asarray(out_train)
    ref_np = np.asarray(ref)
    # kept elements are scaled copies of the eval output, dropped are exactly zero
    scaled = ref_np / (1.0 - p)
    is_zero = np.isclose(ot, 0.0)
    is_kept = np.isclose(ot, scaled, rtol=1e-5, atol=1e-6)
    assert np.all(np.logical_or(is_zero, is_kept)), "dropout output has invalid values"
    frac_zero = float(is_zero.mean())
    assert 0.0 < frac_zero < 0.4, f"dropout rate looks wrong: {frac_zero}"

    print("KERNEL_OK")
</pallas_src>

<mosaic_0001>
module attributes {stable_mosaic.version = 11 : i64} {
  func.func @_pe_kernel(%arg0: i32, %arg1: memref<1xi32, #tpu.memory_space<smem>>, %arg2: memref<8x64xf32, #tpu.memory_space<vmem>>, %arg3: memref<8x32xf32, #tpu.memory_space<vmem>>, %arg4: memref<8x64xf32, #tpu.memory_space<vmem>>) attributes {dimension_semantics = [#tpu.dimension_semantics<parallel>], iteration_bounds = array<i64: 1>, scalar_prefetch = 1 : i64, scratch_operands = 0 : i64, tpu.core_type = #tpu.core_type<tc>, window_params = [{transform_indices = @transform_0, window_bounds = array<i64: 8, 64>}, {transform_indices = @transform_1, window_bounds = array<i64: 8, 32>}, {transform_indices = @transform_2, window_bounds = array<i64: 8, 64>}]} {
    %c0 = arith.constant 0 : index
    %c0_0 = arith.constant 0 : index
    %0 = vector.load %arg3[%c0, %c0_0] : memref<8x32xf32, #tpu.memory_space<vmem>>, vector<8x32xf32>
    %1 = tpu.concatenate %0, %0 in 1 : vector<8x32xf32>, vector<8x32xf32> -> vector<8x64xf32>
    %c0_1 = arith.constant 0 : index
    %c0_2 = arith.constant 0 : index
    %2 = vector.load %arg2[%c0_1, %c0_2] : memref<8x64xf32, #tpu.memory_space<vmem>>, vector<8x64xf32>
    %3 = arith.addf %2, %1 : vector<8x64xf32>
    %c0_3 = arith.constant 0 : index
    %c0_4 = arith.constant 0 : index
    %4 = vector.load %arg4[%c0_3, %c0_4] : memref<8x64xf32, #tpu.memory_space<vmem>>, vector<8x64xf32>
    tpu.vector_store %arg4[%c0_3, %c0_4], %3 {strides = array<i32>} : memref<8x64xf32, #tpu.memory_space<vmem>>, vector<8x64xf32>,
    return
  }
  func.func @transform_0(%arg0: i32, %arg1: memref<1xi32, #tpu.memory_space<smem>>) -> (i32, i32) {
    %c0_i32 = arith.constant 0 : i32
    %c0_i32_0 = arith.constant 0 : i32
    return %arg0, %c0_i32 : i32, i32
  }
  func.func @transform_1(%arg0: i32, %arg1: memref<1xi32, #tpu.memory_space<smem>>) -> (i32, i32) {
    %c0_i32 = arith.constant 0 : i32
    %c0_i32_0 = arith.constant 0 : i32
    return %arg0, %c0_i32 : i32, i32
  }
  func.func @transform_2(%arg0: i32, %arg1: memref<1xi32, #tpu.memory_space<smem>>) -> (i32, i32) {
    %c0_i32 = arith.constant 0 : i32
    %c0_i32_0 = arith.constant 0 : i32
    return %arg0, %c0_i32 : i32, i32
  }
}

</mosaic_0001>

<llo_original>
// kernel: tpu_custom_call.1
$region0: #{tpu_custom_call.1}
  #allocation0 [shape = 'u32[]', space=smem, size = 0x4, offset = 0x4, fixed_abs, tag = 'smem constant byte address 0x4 - core index']
  #allocation1 [shape = 'u32[144,128]{1,0:T(1,128)}', space=vmem, size = 0x12000, scoped, tag = 'internal scratch']
  #allocation2 [shape = 's32[1]{0}', space=sflag, size = 0x4, scoped, tag = 'scoped memory for tpu_custom_call.1']
  #allocation3 [shape = 's32[1]{0:T(128)S(6)}', space=smem, size = 0x200, scoped, tag = 'prefetched SMEM operand 0']
  %s0 = inlined_call_operand.<no memory space> [shape: s32[1], index: 0, kind: input, shape index: {}]
  %s1 = inlined_call_operand.hbm [shape: f32[8,64], index: 1, kind: input, shape index: {}]
  %s2 = inlined_call_operand.hbm [shape: f32[8,32], index: 2, kind: input, shape index: {}]
  %s3 = inlined_call_operand.hbm [shape: f32[8,64], index: 3, kind: output, shape index: {}]
  %s4 = sld [smem:[#allocation0]]
  $region26: #{tpu_custom_call.1} parent=0
    _
  %s6 = ssub.s32 1, %s4
  %s7 = scalar_select 0, %s6, %s4
  %8 = sst [smem:[#allocation3]] %s0
  $region1: #{tpu_custom_call.1} parent=0
    #allocation4 [shape = 'u8[4096]{0}', space=vmem, size = 0x1000, scoped, tag = 'input window, operand 1, single buffered']
    #allocation5 [shape = 's32[1]{0}', space=sflag, size = 0x4, scoped, tag = 'scoped memory for tpu_custom_call.1']
    #allocation6 [shape = 's32[1]{0}', space=sflag, size = 0x4, scoped, tag = 'scoped memory for tpu_custom_call.1']
    #allocation7 [shape = 'u8[4096]{0}', space=vmem, size = 0x1000, scoped, tag = 'input window, operand 2, single buffered']
    #allocation8 [shape = 's32[1]{0}', space=sflag, size = 0x4, scoped, tag = 'scoped memory for tpu_custom_call.1']
    #allocation9 [shape = 'u8[4096]{0}', space=vmem, size = 0x1000, scoped, tag = 'output window, operand 0, single buffered']
    %9 = vsyncpa [#allocation5], 0
    %10 = vsyncpa [#allocation8], 0
    %11 = vsyncpa [#allocation6], 0
    // Predicated region
    $region2: #{tpu_custom_call.1} parent=1 // pred_check
      _
    $region3: #{tpu_custom_call.1} parent=1 // pred_check_branch
      %13 = sbr.rel (0) target = $region5
    $region4: #{tpu_custom_call.1} parent=1 // pred_region
      %s15 = ssub.s32 128, 128
      %16 = vsyncadd [#allocation5], %s15
      %s18 = sshll.u32 [#allocation4], 4
      %s19 = int_to_ptr.vmem [resolvable:$true] %s18
      %21 = dma.hbm_to_vmem [thread:$0]  %s1, 128, %s19, [#allocation5]
    $region5: #{tpu_custom_call.1} parent=1 // pred_fallthru
      _
    // Predicated region
    $region6: #{tpu_custom_call.1} parent=1 // pred_check
      _
    $region7: #{tpu_custom_call.1} parent=1 // pred_check_branch
      %23 = sbr.rel (0) target = $region9
    $region8: #{tpu_custom_call.1} parent=1 // pred_region
      %s25 = ssub.s32 128, 128
      %26 = vsyncadd [#allocation8], %s25
      %s28 = sshll.u32 [#allocation7], 4
      %s29 = int_to_ptr.vmem [resolvable:$true] %s28
      %31 = dma.hbm_to_vmem [thread:$0]  %s2, 128, %s29, [#allocation8]
    $region9: #{tpu_custom_call.1} parent=1 // pred_fallthru
      _
    // Predicated region
    $region10: #{tpu_custom_call.1} parent=1 // pred_check
      _
    $region11: #{tpu_custom_call.1} parent=1 // pred_check_branch
      %33 = sbr.rel (0) target = $region13
    $region12: #{tpu_custom_call.1} parent=1 // pred_region
      %34 = dma.done [#allocation5], 128
    $region13: #{tpu_custom_call.1} parent=1 // pred_fallthru
      _
    // Predicated region
    $region14: #{tpu_custom_call.1} parent=1 // pred_check
      _
    $region15: #{tpu_custom_call.1} parent=1 // pred_check_branch
      %36 = sbr.rel (0) target = $region17
    $region16: #{tpu_custom_call.1} parent=1 // pred_region
      %37 = dma.done [#allocation8], 128
    $region17: #{tpu_custom_call.1} parent=1 // pred_fallthru
      _
    %v38 = vld [vmem:[#allocation7] sm:$0xff]
    %40 = vrot.lane.b32.xlu0 %v38, 32
    %v41 = vpop.permute.xlu0 %40
    %vm43 = vcmask 261120
    %v44 = vsel %vm43, %v38, %v41
    %v45 = vld [vmem:[#allocation4] sm:$0xff]
    %v46 = vadd.f32 %v45, %v44
    %vm47 = vcmask 523264
    %48 = vst.msk [vmem:[#allocation9] sm:$0xff] %vm47, %v46
    // Predicated region
    $region18: #{tpu_custom_call.1} parent=1 // pred_check
      _
    $region19: #{tpu_custom_call.1} parent=1 // pred_check_branch
      %50 = sbr.rel (0) target = $region21
    $region20: #{tpu_custom_call.1} parent=1 // pred_region
      %s52 = ssub.s32 128, 128
      %53 = vsyncadd [#allocation6], %s52
      %s55 = sshll.u32 [#allocation9], 4
      %s56 = int_to_ptr.vmem [resolvable:$true] %s55
      %58 = dma.vmem_to_hbm [thread:$0]  %s56, 128, %s3, [#allocation6]
    $region21: #{tpu_custom_call.1} parent=1 // pred_fallthru
      _
    // Predicated region
    $region22: #{tpu_custom_call.1} parent=1 // pred_check
      _
    $region23: #{tpu_custom_call.1} parent=1 // pred_check_branch
      %60 = sbr.rel (0) target = $region25
    $region24: #{tpu_custom_call.1} parent=1 // pred_region
      %61 = dma.done [#allocation6], 128
    $region25: #{tpu_custom_call.1} parent=1 // pred_fallthru
      _
    %62 = vsyncpa [#allocation5], 1
    %63 = vsyncpa [#allocation8], 1
    %64 = vsyncpa [#allocation6], 1

</llo_original>
